<compile_context>
chip_gen: v5e
topology: v5e:2x2
jax: 0.10.0
libtpu: 0.0.40
codegen_flags: <defaults>
</compile_context>

<pallas_src>
from functools import partial

import jax
import jax.numpy as jnp
from jax.experimental import pallas as pl
from jax.experimental.pallas import tpu as pltpu


def _round_up(x, m):
    return ((x + m - 1) // m) * m


def _focal_loss_kernel(logits_ref, targets_ref, out_ref, *, alpha, gamma, n_rows, tile_n):
    i = pl.program_id(0)

    # Single f32 upcast of the tile (inputs may be bf16; v5e has no bf16 VPU/EUP).
    x = logits_ref[...].astype(jnp.float32)            # (tile_n, C)
    t = targets_ref[...]                                # (tile_n, 1) int32

    # Shift once and reuse: lse = m + log(sum(exp(s))), x[t] = s[t] + m, so the
    # max term cancels in ce = lse - x[t] = log(sum(exp(s))) - s[t].
    m = jnp.max(x, axis=-1, keepdims=True)                                   # (tile_n, 1)
    s = x - m                                                                # (tile_n, C)
    sumexp = jnp.sum(jnp.exp(s), axis=-1, keepdims=True)                     # (tile_n, 1)

    # Target-class gather via a where-select against a lane iota (idiomatic
    # per-row gather on TPU; no per-row scalar reads, no one-hot multiply).
    cls = jax.lax.broadcasted_iota(jnp.int32, s.shape, 1)                    # (tile_n, C)
    tgt_s = jnp.sum(jnp.where(cls == t, s, 0.0), axis=-1, keepdims=True)     # (tile_n, 1)

    ce = jnp.log(sumexp) - tgt_s                                             # (tile_n, 1)
    pt = jnp.exp(-ce)
    u = jnp.maximum(1.0 - pt, 0.0)
    if float(gamma) == int(gamma) and gamma >= 0:
        # Integer gamma (default 2): explicit VPU products instead of EUP pow.
        w = jnp.ones_like(u)
        for _ in range(int(gamma)):
            w = w * u
    else:
        w = u ** gamma
    f_loss = alpha * w * ce                                                  # (tile_n, 1)

    # Zero out rows past the true batch (padding added so N % tile_n == 0).
    row = i * tile_n + jax.lax.broadcasted_iota(jnp.int32, f_loss.shape, 0)
    f_loss = jnp.where(row < n_rows, f_loss, 0.0)

    # Per-tile partial sum (tiles are independent -> "parallel" grid axis).
    out_ref[...] = jnp.reshape(jnp.sum(f_loss), (1, 1, 1))


def focal_loss(logits, targets, alpha=1.0, gamma=2.0, reduction="mean", tile_n=None):
    """logits: (N, C) float (any float dtype); targets: (N,) int class indices.

    Returns a scalar f32 loss matching the PyTorch FocalLoss forward pass.
    """
    assert reduction in ("mean", "sum")
    n, c = logits.shape
    itemsize = jnp.dtype(logits.dtype).itemsize
    targets_2d = targets.astype(jnp.int32).reshape(n, 1)

    row_mult = 16  # multiple of 16 rows: valid sublane granularity for f32 and bf16

    # Tile sizing: budget against the lane-padded class dim and the in-kernel
    # f32 working size (not the bf16 HBM itemsize).  ~4 MiB f32 per block keeps
    # grid-step overhead (~0.35 us) negligible while the whole pipeline
    # (Buffered(3) inputs + f32 temporaries) stays far below 48 MiB VMEM.
    c_pad = _round_up(c, 128)
    if tile_n is None:
        budget_f32_bytes = 4 * 1024 * 1024
        tile_n = budget_f32_bytes // (c_pad * 4)
        tile_n = max(row_mult, min(8192, (tile_n // row_mult) * row_mult))
        # Don't exceed the (padded) batch.
        tile_n = min(tile_n, max(row_mult, _round_up(n, row_mult)))
        # Keep >= 2 tiles when the batch allows it so v7x's two TensorCores can
        # both stream via the "parallel" grid axis.
        if n > 2 * row_mult:
            tile_n = min(tile_n, max(row_mult, _round_up(pl.cdiv(n, 2), row_mult)))
        tile_n = max(row_mult, (tile_n // row_mult) * row_mult)
    else:
        tile_n = max(8, int(tile_n))

    n_pad = pl.cdiv(n, tile_n) * tile_n
    if n_pad != n:
        logits = jnp.pad(logits, ((0, n_pad - n), (0, 0)))
        targets_2d = jnp.pad(targets_2d, ((0, n_pad - n), (0, 0)))
    num_tiles = n_pad // tile_n

    cost = pl.CostEstimate(
        flops=6 * n * c,                       # max/sub/cmp/select/add/mul per element
        transcendentals=n * c + 2 * n,         # exp(s), exp(-ce), log
        bytes_accessed=n * c * itemsize + n * 4 + num_tiles * 4,
    )

    kernel = partial(
        _focal_loss_kernel,
        alpha=float(alpha),
        gamma=float(gamma),
        n_rows=n,
        tile_n=tile_n,
    )

    def _call(buffered):
        if buffered and hasattr(pl, "Buffered"):
            logits_spec = pl.BlockSpec(
                (tile_n, c), lambda i: (i, 0), pipeline_mode=pl.Buffered(3)
            )
        else:
            logits_spec = pl.BlockSpec((tile_n, c), lambda i: (i, 0))
        return pl.pallas_call(
            kernel,
            out_shape=jax.ShapeDtypeStruct((num_tiles, 1, 1), jnp.float32),
            grid=(num_tiles,),
            in_specs=[
                logits_spec,                                   # logits row tile (native dtype)
                pl.BlockSpec((tile_n, 1), lambda i: (i, 0)),   # targets row tile
            ],
            out_specs=pl.BlockSpec((1, 1, 1), lambda i: (i, 0, 0)),
            compiler_params=pltpu.CompilerParams(
                dimension_semantics=("parallel",),
                vmem_limit_bytes=48 * 1024 * 1024,   # safe on v7x (64 MiB), ample elsewhere
            ),
            cost_estimate=cost,
        )(logits, targets_2d)

    try:
        partials = _call(buffered=True)
    except Exception:
        # Fallback if pipeline_mode=pl.Buffered is unsupported in this JAX build.
        partials = _call(buffered=False)

    total = jnp.sum(partials)
    if reduction == "mean":
        total = total / jnp.float32(n)
    return total


def _focal_loss_ref(logits, targets, alpha=1.0, gamma=2.0, reduction="mean"):
    """Pure-JAX reference mirroring the PyTorch module."""
    logp = jax.nn.log_softmax(logits.astype(jnp.float32), axis=-1)
    ce = -jnp.take_along_axis(logp, targets[:, None].astype(jnp.int32), axis=-1)[:, 0]
    pt = jnp.exp(-ce)
    fl = alpha * (1.0 - pt) ** gamma * ce
    return fl.mean() if reduction == "mean" else fl.sum()


if __name__ == "__main__":
    key = jax.random.PRNGKey(0)
    k_logits, k_targets, k_logits2, k_targets2 = jax.random.split(key, 4)

    # Small shapes consistent with the module: 8 examples, 32 classes.
    N, C = 8, 32
    logits = jax.random.normal(k_logits, (N, C), dtype=jnp.float32)
    targets = jax.random.randint(k_targets, (N,), 0, C, dtype=jnp.int32)

    loss = focal_loss(logits, targets, alpha=1.0, gamma=2.0, reduction="mean")
    loss = jax.block_until_ready(loss)
    ref = _focal_loss_ref(logits, targets, alpha=1.0, gamma=2.0, reduction="mean")
    assert jnp.allclose(loss, ref, rtol=1e-5, atol=1e-5), (loss, ref)

    # Non-multiple-of-tile batch (exercises row padding + masking) with 'sum'.
    N2, C2 = 13, 40
    logits2 = jax.random.normal(k_logits2, (N2, C2), dtype=jnp.float32)
    targets2 = jax.random.randint(k_targets2, (N2,), 0, C2, dtype=jnp.int32)
    loss2 = jax.block_until_ready(
        focal_loss(logits2, targets2, alpha=1.0, gamma=2.0, reduction="sum", tile_n=8)
    )
    ref2 = _focal_loss_ref(logits2, targets2, alpha=1.0, gamma=2.0, reduction="sum")
    assert jnp.allclose(loss2, ref2, rtol=1e-5, atol=1e-5), (loss2, ref2)

    # Native bf16 logits stay bf16 in HBM (half the bytes); upcast is in-kernel.
    loss_bf16 = jax.block_until_ready(
        focal_loss(logits.astype(jnp.bfloat16), targets, reduction="mean")
    )
    ref_bf16 = _focal_loss_ref(logits.astype(jnp.bfloat16), targets, reduction="mean")
    assert jnp.allclose(loss_bf16, ref_bf16, rtol=2e-2, atol=2e-2), (loss_bf16, ref_bf16)

    print("KERNEL_OK")
</pallas_src>

<mosaic_0001>
module attributes {stable_mosaic.version = 11 : i64} {
  func.func @_focal_loss_kernel(%arg0: i32, %arg1: memref<16x32xf32, #tpu.memory_space<vmem>>, %arg2: memref<16x1xi32, #tpu.memory_space<vmem>>, %arg3: memref<1x1x1xf32, #tpu.memory_space<vmem>>) attributes {dimension_semantics = [#tpu.dimension_semantics<parallel>], iteration_bounds = array<i64: 1>, scalar_prefetch = 0 : i64, scratch_operands = 0 : i64, tpu.core_type = #tpu.core_type<tc>, window_params = [{transform_indices = @transform_0, window_bounds = array<i64: 16, 32>}, {transform_indices = @transform_1, window_bounds = array<i64: 16, 1>}, {transform_indices = @transform_2, window_bounds = array<i64: 1, 1, 1>}]} {
    %c0 = arith.constant 0 : index
    %c0_0 = arith.constant 0 : index
    %0 = vector.load %arg1[%c0, %c0_0] : memref<16x32xf32, #tpu.memory_space<vmem>>, vector<16x32xf32>
    %c0_1 = arith.constant 0 : index
    %c0_2 = arith.constant 0 : index
    %1 = vector.load %arg2[%c0_1, %c0_2] : memref<16x1xi32, #tpu.memory_space<vmem>>, vector<16x1xi32>
    %cst = arith.constant dense<0xFF800000> : vector<16xf32>
    %2 = vector.multi_reduction <maximumf>, %0, %cst [1] : vector<16x32xf32> to vector<16xf32>
    %3 = vector.shape_cast %2 : vector<16xf32> to vector<16x1xf32>
    %4 = vector.broadcast %3 : vector<16x1xf32> to vector<16x32xf32>
    %5 = arith.subf %0, %4 : vector<16x32xf32>
    %6 = math.exp %5 : vector<16x32xf32>
    %cst_3 = arith.constant dense<0.000000e+00> : vector<16xf32>
    %7 = vector.multi_reduction <add>, %6, %cst_3 [1] : vector<16x32xf32> to vector<16xf32>
    %8 = vector.shape_cast %7 : vector<16xf32> to vector<16x1xf32>
    %9 = tpu.iota {dimensions = array<i32: 1>} : vector<16x32xi32>
    %10 = vector.broadcast %1 : vector<16x1xi32> to vector<16x32xi32>
    %11 = arith.cmpi eq, %9, %10 : vector<16x32xi32>
    %cst_4 = arith.constant 0.000000e+00 : f32
    %12 = vector.broadcast %cst_4 : f32 to vector<16x32xf32>
    %13 = arith.select %11, %5, %12 : vector<16x32xi1>, vector<16x32xf32>
    %cst_5 = arith.constant dense<0.000000e+00> : vector<16xf32>
    %14 = vector.multi_reduction <add>, %13, %cst_5 [1] : vector<16x32xf32> to vector<16xf32>
    %15 = vector.shape_cast %14 : vector<16xf32> to vector<16x1xf32>
    %16 = math.log %8 : vector<16x1xf32>
    %17 = arith.subf %16, %15 : vector<16x1xf32>
    %cst_6 = arith.constant 0.000000e+00 : f32
    %18 = vector.broadcast %cst_6 : f32 to vector<16x1xf32>
    %19 = arith.subf %18, %17 : vector<16x1xf32>
    %20 = math.exp %19 : vector<16x1xf32>
    %cst_7 = arith.constant 1.000000e+00 : f32
    %21 = vector.broadcast %cst_7 : f32 to vector<16x1xf32>
    %22 = arith.subf %21, %20 : vector<16x1xf32>
    %cst_8 = arith.constant 0.000000e+00 : f32
    %23 = vector.broadcast %cst_8 : f32 to vector<16x1xf32>
    %24 = arith.maximumf %22, %23 : vector<16x1xf32>
    %cst_9 = arith.constant 1.000000e+00 : f32
    %25 = vector.broadcast %cst_9 : f32 to vector<16x1xf32>
    %26 = arith.mulf %25, %24 : vector<16x1xf32>
    %27 = arith.mulf %26, %24 : vector<16x1xf32>
    %cst_10 = arith.constant 1.000000e+00 : f32
    %28 = vector.broadcast %cst_10 : f32 to vector<16x1xf32>
    %29 = arith.mulf %28, %27 : vector<16x1xf32>
    %30 = arith.mulf %29, %17 : vector<16x1xf32>
    %c16_i32 = arith.constant 16 : i32
    %31 = arith.muli %arg0, %c16_i32 : i32
    %32 = tpu.iota {dimensions = array<i32: 0>} : vector<16x1xi32>
    %33 = vector.broadcast %31 : i32 to vector<16x1xi32>
    %34 = arith.addi %33, %32 : vector<16x1xi32>
    %c8_i32 = arith.constant 8 : i32
    %35 = vector.broadcast %c8_i32 : i32 to vector<16x1xi32>
    %36 = arith.cmpi slt, %34, %35 : vector<16x1xi32>
    %cst_11 = arith.constant 0.000000e+00 : f32
    %37 = vector.broadcast %cst_11 : f32 to vector<16x1xf32>
    %38 = arith.select %36, %30, %37 : vector<16x1xi1>, vector<16x1xf32>
    %39 = vector.shape_cast %38 : vector<16x1xf32> to vector<1x16x1xf32>
    %cst_12 = arith.constant dense<0.000000e+00> : vector<1xf32>
    %40 = vector.multi_reduction <add>, %39, %cst_12 [1, 2] : vector<1x16x1xf32> to vector<1xf32>
    %41 = vector.shape_cast %40 : vector<1xf32> to vector<1x1x1xf32>
    %42 = vector.extract %41[0, 0, 0] : f32 from vector<1x1x1xf32>
    %43 = vector.broadcast %42 : f32 to vector<1x1x1xf32>
    %c0_13 = arith.constant 0 : index
    %c0_14 = arith.constant 0 : index
    %c0_15 = arith.constant 0 : index
    %44 = vector.load %arg3[%c0_13, %c0_14, %c0_15] : memref<1x1x1xf32, #tpu.memory_space<vmem>>, vector<1x1x1xf32>
    tpu.vector_store %arg3[%c0_13, %c0_14, %c0_15], %43 {strides = array<i32>} : memref<1x1x1xf32, #tpu.memory_space<vmem>>, vector<1x1x1xf32>,
    return
  }
  func.func @transform_0(%arg0: i32) -> (i32, i32) {
    %c0_i32 = arith.constant 0 : i32
    %c0_i32_0 = arith.constant 0 : i32
    return %arg0, %c0_i32 : i32, i32
  }
  func.func @transform_1(%arg0: i32) -> (i32, i32) {
    %c0_i32 = arith.constant 0 : i32
    %c0_i32_0 = arith.constant 0 : i32
    return %arg0, %c0_i32 : i32, i32
  }
  func.func @transform_2(%arg0: i32) -> (i32, i32, i32) {
    %c0_i32 = arith.constant 0 : i32
    %c0_i32_0 = arith.constant 0 : i32
    %c0_i32_1 = arith.constant 0 : i32
    return %arg0, %c0_i32, %c0_i32_0 : i32, i32, i32
  }
}

</mosaic_0001>

<llo_original>
// kernel: tpu_custom_call.1
$region0: #{tpu_custom_call.1}
  #allocation0 [shape = 'u32[]', space=smem, size = 0x4, offset = 0x4, fixed_abs, tag = 'smem constant byte address 0x4 - core index']
  #allocation1 [shape = 'u32[72,128]{1,0:T(1,128)}', space=vmem, size = 0x9000, scoped, tag = 'internal scratch']
  %s0 = inlined_call_operand.vmem [shape: f32[16,32], index: 0, kind: input, shape index: {}]
  %s1 = inlined_call_operand.vmem [shape: s32[16,1], index: 1, kind: input, shape index: {}]
  %s2 = inlined_call_operand.hbm [shape: f32[1,1,1], index: 2, kind: output, shape index: {}]
  %s3 = sld [smem:[#allocation0]]
  $region18: #{tpu_custom_call.1} parent=0
    _
  %s5 = ssub.s32 1, %s3
  %s6 = scalar_select 0, %s5, %s3
  $region1: #{tpu_custom_call.1} parent=0
    #allocation2 [shape = 'u8[512]{0}', space=vmem, size = 0x400, scoped, tag = 'output window, operand 0, single buffered']
    #allocation3 [shape = 's32[1]{0}', space=sflag, size = 0x4, scoped, tag = 'scoped memory for tpu_custom_call.1']
    %7 = vsyncpa [#allocation3], 0
    // Predicated region
    $region2: #{tpu_custom_call.1} parent=1 // pred_check
      _
    $region3: #{tpu_custom_call.1} parent=1 // pred_check_branch
      %9 = sbr.rel (0) target = $region5
    $region4: #{tpu_custom_call.1} parent=1 // pred_region
      _
    $region5: #{tpu_custom_call.1} parent=1 // pred_fallthru
      _
    // Predicated region
    $region6: #{tpu_custom_call.1} parent=1 // pred_check
      _
    $region7: #{tpu_custom_call.1} parent=1 // pred_check_branch
      %11 = sbr.rel (0) target = $region9
    $region8: #{tpu_custom_call.1} parent=1 // pred_region
      _
    $region9: #{tpu_custom_call.1} parent=1 // pred_fallthru
      _
    %v12 = vld [vmem:[%s0] sm:$0xff]
    %v13 = vld [vmem:[%s0 + $0x8] sm:$0xff]
    %v14 = vld [vmem:[%s1] sm:$0xff]
    %v15 = vld [vmem:[%s1 + $0x8] sm:$0xff]
    %vm16 = vcmask 261120
    %v17 = vsel %vm16, %v12, -inf
    %18 = vmax.xlane.f32.xlu0 %v17
    %v19 = vpop.xlane.xlu0 %18
    %v20 = vsel %vm16, %v13, -inf
    %21 = vmax.xlane.f32.xlu0 %v20
    %v22 = vpop.xlane.xlu0 %21
    %v23 = vsub.f32 %v12, %v19
    %v24 = vsub.f32 %v13, %v22
    %v25 = vmul.f32 %v23, 1.442695
    %v26 = vpow.pop %v25
    %v27 = vmul.f32 %v24, 1.442695
    %v28 = vpow.pop %v27
    %v29 = vsel %vm16, %v26, 0.0
    %30 = vadd.xlane.f32.xlu0 %v29
    %v31 = vpop.xlane.xlu0 %30
    %v32 = vsel %vm16, %v28, 0.0
    %33 = vadd.xlane.f32.xlu0 %v32
    %v34 = vpop.xlane.xlu0 %33
    %v35 = vlaneseq
    %v36 = vand.u32 %v35, 127
    %37 = vset.pattern.permute.xlu0 0
    %38 = vperm.xlu0 %37, %v14
    %v39 = vpop.permute.xlu0 %38
    %40 = vset.pattern.permute.xlu0 0
    %41 = vperm.xlu0 %40, %v15
    %v42 = vpop.permute.xlu0 %41
    %vm43 = vcmp.eq.s32.totalorder %v36, %v39
    %vm44 = vcmp.eq.s32.totalorder %v36, %v42
    %v45 = vsel %vm43, %v23, 0.0
    %v46 = vsel %vm44, %v24, 0.0
    %v47 = vsel %vm16, %v45, 0.0
    %48 = vadd.xlane.f32.xlu0 %v47
    %v49 = vpop.xlane.xlu0 %48
    %v50 = vsel %vm16, %v46, 0.0
    %51 = vadd.xlane.f32.xlu0 %v50
    %v52 = vpop.xlane.xlu0 %51
    %v53 = vlog2.pop %v31
    %v54 = vmul.f32 %v53, 0.6931472
    %v55 = vlog2.pop %v34
    %v56 = vmul.f32 %v55, 0.6931472
    %v57 = vsub.f32 %v54, %v49
    %v58 = vsub.f32 %v56, %v52
    %v59 = vsub.f32 0.0, %v57
    %v60 = vsub.f32 0.0, %v58
    %v61 = vmul.f32 %v59, 1.442695
    %v62 = vpow.pop %v61
    %v63 = vmul.f32 %v60, 1.442695
    %v64 = vpow.pop %v63
    %v65 = vsub.f32 1.0, %v62
    %v66 = vsub.f32 1.0, %v64
    %v67 = vmax.f32 %v65, 0.0
    %v68 = vmax.f32 %v66, 0.0
    %v69 = vmul.f32 %v67, %v67
    %v70 = vmul.f32 %v68, %v68
    %v71 = vmul.f32 %v69, %v57
    %v72 = vmul.f32 %v70, %v58
    %s73 = smul.u32 0, 16
    %v74 = vlaneseq
    %v75 = vshrl.u32 %v74, 7
    %v76 = vadd.s32 %v75, 8
    %v77 = vstv %s73
    %v78 = vadd.s32 %v77, %v75
    %v79 = vadd.s32 %v77, %v76
    %vm80 = vcmp.lt.s32.totalorder %v78, 8
    %vm81 = vcmp.lt.s32.totalorder %v79, 8
    %v82 = vsel %vm80, %v71, 0.0
    %v83 = vsel %vm81, %v72, 0.0
    %vm84 = vcmask 7168
    %v85 = vsel %vm84, %v82, 0.0
    %v86 = vsel %vm84, %v83, 0.0
    %v87 = vadd.f32 %v85, %v86
    %88 = vadd.xlane.f32.xlu0 %v87
    %v89 = vpop.xlane.xlu0 %88
    %v90 = vrot.slane %v89, 4
    %v91 = vadd.f32 %v89, %v90
    %v92 = vrot.slane %v91, 2
    %v93 = vadd.f32 %v91, %v92
    %v94 = vrot.slane %v93, 1
    %v95 = vadd.f32 %v93, %v94
    %s96 = vtos %v95
    %v97 = vstv %s96
    %vm98 = vcmask 0
    %99 = vst.msk [vmem:[#allocation2] sm:$0x1] %vm98, %v97
    // Predicated region
    $region10: #{tpu_custom_call.1} parent=1 // pred_check
      _
    $region11: #{tpu_custom_call.1} parent=1 // pred_check_branch
      %101 = sbr.rel (0) target = $region13
    $region12: #{tpu_custom_call.1} parent=1 // pred_region
      %103 = vsyncadd [#allocation3], 0
      %s105 = sshll.u32 [#allocation2], 4
      %s106 = int_to_ptr.vmem [resolvable:$true] %s105
      %s107 = sshll.u32 %s2, 4
      %s108 = int_to_ptr.hbm [resolvable:$true] %s107
      %110 = dma.vmem_to_hbm [thread:$0]  %s106, 16, %s108, [#allocation3]
    $region13: #{tpu_custom_call.1} parent=1 // pred_fallthru
      _
    // Predicated region
    $region14: #{tpu_custom_call.1} parent=1 // pred_check
      _
    $region15: #{tpu_custom_call.1} parent=1 // pred_check_branch
      %112 = sbr.rel (0) target = $region17
    $region16: #{tpu_custom_call.1} parent=1 // pred_region
      %114 = dma.done [#allocation3], 16
    $region17: #{tpu_custom_call.1} parent=1 // pred_fallthru
      _
    %115 = vsyncpa [#allocation3], 1

</llo_original>
